<compile_context>
chip_gen: v6e
topology: v6e:2x2x1
jax: 0.10.0
libtpu: 0.0.40
codegen_flags: <defaults>
</compile_context>

<pallas_src>
import numpy as np
import jax
import jax.numpy as jnp
from jax.experimental import pallas as pl
from jax.experimental.pallas import tpu as pltpu

LN_EPS = 1e-5  # PyTorch nn.LayerNorm default


def _is_v7x() -> bool:
    try:
        kind = jax.devices()[0].device_kind.lower()
    except Exception:
        return False
    return ("v7" in kind) or ("7x" in kind)


# ---------------------------------------------------------------------------
# Kernel 1 (tiny, single grid step): controller Linear + LayerNorm(48)
#   -> dynamic filter (B*N, 48)
# ---------------------------------------------------------------------------
def _controller_ln_kernel(q_ref,    # (BN, Dh)  seg_query, all batches flattened
                          wc_ref,   # (Dh, 48)  controller weight (in, out) layout
                          bc_ref,   # (1, 48)   controller bias
                          g_ref,    # (1, 48)   LayerNorm gamma
                          be_ref,   # (1, 48)   LayerNorm beta
                          w_ref):   # (BN, 48)  output dynamic filter
    q = q_ref[...].astype(jnp.float32)                                    # (BN, Dh)
    w = jnp.dot(q, wc_ref[...].astype(jnp.float32),
                preferred_element_type=jnp.float32) + bc_ref[...]         # (BN, 48)
    mu = jnp.mean(w, axis=-1, keepdims=True)
    var = jnp.mean((w - mu) * (w - mu), axis=-1, keepdims=True)
    w = (w - mu) * jax.lax.rsqrt(var + LN_EPS)
    w_ref[...] = (w * g_ref[...] + be_ref[...]).astype(w_ref.dtype)


# ---------------------------------------------------------------------------
# Kernel 2 (streaming, memory-bound): logits(N, tS) = weight(N, C) @ feat(C, tS)
# ---------------------------------------------------------------------------
def _dyn_filter_matmul_kernel(w_ref,     # (1, N, C)     dynamic filter for batch b
                              feat_ref,  # (1, C, tS)    backbone features tile
                              out_ref):  # (1, N, tS)    logits tile
    out_ref[0] = jnp.dot(
        w_ref[0], feat_ref[0], preferred_element_type=jnp.float32
    ).astype(out_ref.dtype)


def cat_head(seg_query, controller_w, controller_b, ln_g, ln_b, out_feats,
             *, tile_s=None, out_dtype=jnp.bfloat16, filter_dtype=None):
    """seg_query: (B, N, Dh); out_feats: (B, C=48, D, H, W) -> logits (B, N, D, H, W).

    out_feats MUST already be a <=2-byte dtype (bf16 recommended) — the streaming kernel is
    HBM-bound and the whole roofline argument depends on not streaming f32 features.
    out_dtype defaults to bf16 (f32 accumulation on the MXU, cast only on store).
    filter_dtype defaults to the feature dtype (keeps both MXU operands bf16); pass
    jnp.float32 to keep the dynamic filter at full precision like the PyTorch module.
    """
    B, N, Dh = seg_query.shape
    _, C, D, H, W = out_feats.shape
    S = D * H * W

    feat_dtype = out_feats.dtype
    if np.dtype(feat_dtype).itemsize > 2:
        raise ValueError(
            "cat_head: out_feats must arrive in a <=2-byte dtype (e.g. bf16); "
            f"got {feat_dtype}. Convert it in the backbone, not here (a .astype here "
            "would be an extra full HBM read+write pass).")
    feats_flat = out_feats.reshape(B, C, S)
    if filter_dtype is None:
        filter_dtype = feat_dtype

    # ---- Kernel 1: dynamic filter for all batches in ONE grid step ----
    weight = pl.pallas_call(
        _controller_ln_kernel,
        out_shape=jax.ShapeDtypeStruct((B * N, C), filter_dtype),
        grid_spec=pltpu.PrefetchScalarGridSpec(
            num_scalar_prefetch=0,
            grid=(1,),
            in_specs=[
                pl.BlockSpec((B * N, Dh), lambda i: (0, 0)),   # seg_query (flattened)
                pl.BlockSpec((Dh, C),     lambda i: (0, 0)),   # controller W
                pl.BlockSpec((1, C),      lambda i: (0, 0)),   # controller b
                pl.BlockSpec((1, C),      lambda i: (0, 0)),   # LN gamma
                pl.BlockSpec((1, C),      lambda i: (0, 0)),   # LN beta
            ],
            out_specs=pl.BlockSpec((B * N, C), lambda i: (0, 0)),
        ),
        compiler_params=pltpu.CompilerParams(dimension_semantics=("arbitrary",)),
    )(seg_query.reshape(B * N, Dh), controller_w, controller_b.reshape(1, C),
      ln_g.reshape(1, C), ln_b.reshape(1, C)).reshape(B, N, C)

    # ---- Spatial tile selection (bandwidth-optimal, generation-safe) ----
    v7x = _is_v7x()
    if tile_s is None:
        # Larger default on v7x: at 3.2 TB/s HBM the fixed ~0.35 us per-grid-step cost
        # becomes a meaningful tax for small tiles; 8192 is already near the roofline
        # knee on v5e/v6e.
        tile_s = 32768 if v7x else 8192

    if tile_s >= S:
        if B >= 2 or S < 256:
            tile_s = S                       # full spatial extent as one block (always legal)
            grid_s = 1
        else:
            # B == 1: keep at least 2 grid points so both v7x TensorCores get work.
            tile_s = max(128, ((S + 1) // 2 // 128) * 128)
            grid_s = pl.cdiv(S, tile_s)
    else:
        tile_s = max(128, (tile_s // 128) * 128)   # lane-dense, 128-multiple tiles
        grid_s = pl.cdiv(S, tile_s)                # tail block handled by Pallas masking

    # Raise the scoped-VMEM limit only if the double-buffered working set needs it
    # (keeps v5e's 16 MiB scoped default safe; cap lower on v7x's 64 MiB physical VMEM).
    feat_bytes = np.dtype(feat_dtype).itemsize
    out_bytes = np.dtype(out_dtype).itemsize
    w_bytes = np.dtype(filter_dtype).itemsize
    vmem_est = 2 * tile_s * (C * feat_bytes + N * out_bytes) + 2 * N * C * w_bytes
    cp_kwargs = dict(dimension_semantics=("parallel", "parallel"))
    if vmem_est > 12 * (1 << 20):
        vmem_cap = (40 << 20) if v7x else (48 << 20)
        cp_kwargs["vmem_limit_bytes"] = min(int(1.5 * vmem_est) + (8 << 20), vmem_cap)

    # ---- Kernel 2: streaming dynamic-filter matmul over the spatial axis ----
    logits = pl.pallas_call(
        _dyn_filter_matmul_kernel,
        out_shape=jax.ShapeDtypeStruct((B, N, S), out_dtype),
        grid_spec=pltpu.PrefetchScalarGridSpec(
            num_scalar_prefetch=0,
            grid=(B, grid_s),
            in_specs=[
                pl.BlockSpec((1, N, C),      lambda b, s: (b, 0, 0)),  # filter (resident per b)
                pl.BlockSpec((1, C, tile_s), lambda b, s: (b, 0, s)),  # features
            ],
            out_specs=pl.BlockSpec((1, N, tile_s), lambda b, s: (b, 0, s)),
        ),
        compiler_params=pltpu.CompilerParams(**cp_kwargs),
    )(weight, feats_flat)

    return logits.reshape(B, N, D, H, W)


# ---------------------------------------------------------------------------
# Glue: block-diagonal refer mask from CAT.create_block_diagonal_mask
# (faithful re-implementation; consumed only by PromptRefer, which is external)
# ---------------------------------------------------------------------------
def create_block_diagonal_mask(block_size=32, num_blocks=2):
    block = np.full((block_size, block_size), -np.inf, dtype=np.float32)
    np.fill_diagonal(block, 0.0)
    block[:25, :25] = 0.0
    map_pair = [[1, 25], [2, 25], [5, 26], [10, 27], [14, 28], [14, 26],
                [15, 29], [16, 29], [17, 30], [1, 31], [2, 31], [25, 31]]
    special_tumor = [[26, 28], [30, 6], [30, 13], [30, 18], [30, 19]]
    for a, b in map_pair:
        block[a, b] = 0.0
        block[b, a] = 0.0
    ap_block = block.copy()
    tp_block = block.copy()
    for a, b in special_tumor:
        ap_block[a, b] = 0.0
    return jnp.asarray(np.concatenate([ap_block, tp_block], axis=1))


# ---------------------------------------------------------------------------
# Pure-JAX reference of the implemented portion (for correctness check)
# ---------------------------------------------------------------------------
def cat_head_ref(seg_query, controller_w, controller_b, ln_g, ln_b, out_feats,
                 *, filter_dtype=None):
    B, N, Dh = seg_query.shape
    _, C, D, H, W = out_feats.shape
    if filter_dtype is None:
        filter_dtype = out_feats.dtype
    w = jnp.einsum("bnd,dc->bnc",
                   seg_query.astype(jnp.float32),
                   controller_w.astype(jnp.float32)) + controller_b
    mu = jnp.mean(w, axis=-1, keepdims=True)
    var = jnp.mean((w - mu) ** 2, axis=-1, keepdims=True)
    w = (w - mu) / jnp.sqrt(var + LN_EPS) * ln_g + ln_b
    w = w.astype(filter_dtype)                            # same quantization as kernel path
    feats = out_feats.reshape(B, C, D * H * W).astype(jnp.float32)
    logits = jnp.einsum("bnc,bcs->bns", w.astype(jnp.float32), feats)
    return logits.reshape(B, N, D, H, W)


def _check(B, N, Dh, C, D, H, W, key, out_dtype):
    k1, k2, k3, k4 = jax.random.split(key, 4)
    # self.seg_query = nn.Embedding(out_channels, dims[0]) (after attend-layer refinement,
    # represented here directly at dims[-1]); batched over B as in forward()
    seg_query = 0.02 * jax.random.normal(k1, (N, Dh), dtype=jnp.float32)
    seg_query = jnp.broadcast_to(seg_query[None], (B, N, Dh))
    # self.controller = nn.Linear(dims[-1], 48) ; self.out_norm_layer = nn.LayerNorm(48)
    controller_w = 0.02 * jax.random.normal(k2, (Dh, C), dtype=jnp.float32)  # (in, out)
    controller_b = 0.01 * jax.random.normal(k3, (C,), dtype=jnp.float32)
    ln_g = jnp.ones((C,), dtype=jnp.float32)
    ln_b = jnp.zeros((C,), dtype=jnp.float32)
    # Backbone 48-channel decoder output (stand-in for SwinUNETR's `out`), streamed as bf16.
    out_feats = jax.random.normal(k4, (B, C, D, H, W), dtype=jnp.float32).astype(jnp.bfloat16)

    logits = cat_head(seg_query, controller_w, controller_b, ln_g, ln_b, out_feats,
                      out_dtype=out_dtype)
    logits = jax.block_until_ready(logits)
    assert logits.shape == (B, N, D, H, W)
    assert logits.dtype == out_dtype

    ref = cat_head_ref(seg_query, controller_w, controller_b, ln_g, ln_b, out_feats)
    np.testing.assert_allclose(np.asarray(logits, dtype=np.float32),
                               np.asarray(ref, dtype=np.float32),
                               rtol=3e-2, atol=3e-2)


if __name__ == "__main__":
    # Small synthetic configuration consistent with CAT's forward:
    #   out_channels (N) = 32 segmentation queries, dims[-1] (Dh) = 96,
    #   backbone decoder output has C = feature_size = 48 channels.
    key = jax.random.PRNGKey(0)
    ka, kb = jax.random.split(key)

    # 1) bf16-output default path, B=2, 128-multiple spatial volume.
    _check(B=2, N=32, Dh=96, C=48, D=8, H=8, W=8, key=ka, out_dtype=jnp.bfloat16)

    # 2) B=1 + non-128-multiple spatial volume: exercises the grid-split (>=2 programs for
    #    v7x megacore) and the Pallas-masked partial tail block; f32 output path.
    _check(B=1, N=32, Dh=96, C=48, D=7, H=7, W=7, key=kb, out_dtype=jnp.float32)

    # Mask built exactly as in the module (unused here: PromptRefer is external).
    refer_mask = create_block_diagonal_mask(block_size=32, num_blocks=2)
    assert refer_mask.shape == (32, 64)

    print("KERNEL_OK")
</pallas_src>

<mosaic_0001>
module attributes {stable_mosaic.version = 11 : i64} {
  func.func @_controller_ln_kernel(%arg0: i32, %arg1: memref<64x96xf32, #tpu.memory_space<vmem>>, %arg2: memref<96x48xf32, #tpu.memory_space<vmem>>, %arg3: memref<1x48xf32, #tpu.memory_space<vmem>>, %arg4: memref<1x48xf32, #tpu.memory_space<vmem>>, %arg5: memref<1x48xf32, #tpu.memory_space<vmem>>, %arg6: memref<64x48xbf16, #tpu.memory_space<vmem>>) attributes {dimension_semantics = [#tpu.dimension_semantics<arbitrary>], iteration_bounds = array<i64: 1>, scalar_prefetch = 0 : i64, scratch_operands = 0 : i64, tpu.core_type = #tpu.core_type<tc>, window_params = [{pipeline_mode = #tpu.pipeline_mode<synchronous>, transform_indices = @transform_0, window_bounds = array<i64: 64, 96>}, {pipeline_mode = #tpu.pipeline_mode<synchronous>, transform_indices = @transform_1, window_bounds = array<i64: 96, 48>}, {pipeline_mode = #tpu.pipeline_mode<synchronous>, transform_indices = @transform_2, window_bounds = array<i64: 1, 48>}, {pipeline_mode = #tpu.pipeline_mode<synchronous>, transform_indices = @transform_3, window_bounds = array<i64: 1, 48>}, {pipeline_mode = #tpu.pipeline_mode<synchronous>, transform_indices = @transform_4, window_bounds = array<i64: 1, 48>}, {pipeline_mode = #tpu.pipeline_mode<synchronous>, transform_indices = @transform_5, window_bounds = array<i64: 64, 48>}]} {
    %c0 = arith.constant 0 : index
    %c0_0 = arith.constant 0 : index
    %0 = vector.load %arg1[%c0, %c0_0] : memref<64x96xf32, #tpu.memory_space<vmem>>, vector<64x96xf32>
    %c0_1 = arith.constant 0 : index
    %c0_2 = arith.constant 0 : index
    %1 = vector.load %arg2[%c0_1, %c0_2] : memref<96x48xf32, #tpu.memory_space<vmem>>, vector<96x48xf32>
    %cst = arith.constant dense<0.000000e+00> : vector<64x48xf32>
    %2 = tpu.matmul %0, %1, %cst {dimension_numbers = #tpu.dot_dimension_numbers<[1], [0], [0], [1], [0, 0, 1, 1], [], []>} : vector<64x96xf32>, vector<96x48xf32>, vector<64x48xf32> -> vector<64x48xf32>
    %c0_3 = arith.constant 0 : index
    %c0_4 = arith.constant 0 : index
    %3 = vector.load %arg3[%c0_3, %c0_4] : memref<1x48xf32, #tpu.memory_space<vmem>>, vector<1x48xf32>
    %4 = vector.broadcast %3 : vector<1x48xf32> to vector<64x48xf32>
    %5 = arith.addf %2, %4 : vector<64x48xf32>
    %cst_5 = arith.constant dense<0.000000e+00> : vector<64xf32>
    %6 = vector.multi_reduction <add>, %5, %cst_5 [1] : vector<64x48xf32> to vector<64xf32>
    %7 = vector.shape_cast %6 : vector<64xf32> to vector<64x1xf32>
    %cst_6 = arith.constant 4.800000e+01 : f32
    %8 = vector.broadcast %cst_6 : f32 to vector<64x1xf32>
    %9 = arith.divf %7, %8 : vector<64x1xf32>
    %10 = vector.broadcast %9 : vector<64x1xf32> to vector<64x48xf32>
    %11 = arith.subf %5, %10 : vector<64x48xf32>
    %12 = vector.broadcast %9 : vector<64x1xf32> to vector<64x48xf32>
    %13 = arith.subf %5, %12 : vector<64x48xf32>
    %14 = arith.mulf %11, %13 : vector<64x48xf32>
    %cst_7 = arith.constant dense<0.000000e+00> : vector<64xf32>
    %15 = vector.multi_reduction <add>, %14, %cst_7 [1] : vector<64x48xf32> to vector<64xf32>
    %16 = vector.shape_cast %15 : vector<64xf32> to vector<64x1xf32>
    %cst_8 = arith.constant 4.800000e+01 : f32
    %17 = vector.broadcast %cst_8 : f32 to vector<64x1xf32>
    %18 = arith.divf %16, %17 : vector<64x1xf32>
    %19 = vector.broadcast %9 : vector<64x1xf32> to vector<64x48xf32>
    %20 = arith.subf %5, %19 : vector<64x48xf32>
    %cst_9 = arith.constant 9.99999974E-6 : f32
    %21 = vector.broadcast %cst_9 : f32 to vector<64x1xf32>
    %22 = arith.addf %18, %21 : vector<64x1xf32>
    %23 = math.rsqrt %22 : vector<64x1xf32>
    %24 = vector.broadcast %23 : vector<64x1xf32> to vector<64x48xf32>
    %25 = arith.mulf %20, %24 : vector<64x48xf32>
    %c0_10 = arith.constant 0 : index
    %c0_11 = arith.constant 0 : index
    %26 = vector.load %arg4[%c0_10, %c0_11] : memref<1x48xf32, #tpu.memory_space<vmem>>, vector<1x48xf32>
    %27 = vector.broadcast %26 : vector<1x48xf32> to vector<64x48xf32>
    %28 = arith.mulf %25, %27 : vector<64x48xf32>
    %c0_12 = arith.constant 0 : index
    %c0_13 = arith.constant 0 : index
    %29 = vector.load %arg5[%c0_12, %c0_13] : memref<1x48xf32, #tpu.memory_space<vmem>>, vector<1x48xf32>
    %30 = vector.broadcast %29 : vector<1x48xf32> to vector<64x48xf32>
    %31 = arith.addf %28, %30 : vector<64x48xf32>
    %32 = arith.truncf %31 : vector<64x48xf32> to vector<64x48xbf16>
    %c0_14 = arith.constant 0 : index
    %c0_15 = arith.constant 0 : index
    %33 = vector.load %arg6[%c0_14, %c0_15] : memref<64x48xbf16, #tpu.memory_space<vmem>>, vector<64x48xbf16>
    tpu.vector_store %arg6[%c0_14, %c0_15], %32 {strides = array<i32>} : memref<64x48xbf16, #tpu.memory_space<vmem>>, vector<64x48xbf16>,
    return
  }
  func.func @transform_0(%arg0: i32) -> (i32, i32) {
    %c0_i32 = arith.constant 0 : i32
    %c0_i32_0 = arith.constant 0 : i32
    %c0_i32_1 = arith.constant 0 : i32
    return %c0_i32, %c0_i32_0 : i32, i32
  }
  func.func @transform_1(%arg0: i32) -> (i32, i32) {
    %c0_i32 = arith.constant 0 : i32
    %c0_i32_0 = arith.constant 0 : i32
    %c0_i32_1 = arith.constant 0 : i32
    return %c0_i32, %c0_i32_0 : i32, i32
  }
  func.func @transform_2(%arg0: i32) -> (i32, i32) {
    %c0_i32 = arith.constant 0 : i32
    %c0_i32_0 = arith.constant 0 : i32
    %c0_i32_1 = arith.constant 0 : i32
    return %c0_i32, %c0_i32_0 : i32, i32
  }
  func.func @transform_3(%arg0: i32) -> (i32, i32) {
    %c0_i32 = arith.constant 0 : i32
    %c0_i32_0 = arith.constant 0 : i32
    %c0_i32_1 = arith.constant 0 : i32
    return %c0_i32, %c0_i32_0 : i32, i32
  }
  func.func @transform_4(%arg0: i32) -> (i32, i32) {
    %c0_i32 = arith.constant 0 : i32
    %c0_i32_0 = arith.constant 0 : i32
    %c0_i32_1 = arith.constant 0 : i32
    return %c0_i32, %c0_i32_0 : i32, i32
  }
  func.func @transform_5(%arg0: i32) -> (i32, i32) {
    %c0_i32 = arith.constant 0 : i32
    %c0_i32_0 = arith.constant 0 : i32
    %c0_i32_1 = arith.constant 0 : i32
    return %c0_i32, %c0_i32_0 : i32, i32
  }
}

</mosaic_0001>

<llo_original>
// kernel: tpu_custom_call.1
$region0: #{tpu_custom_call.1}
  #allocation0 [shape = 'u32[]', space=smem, size = 0x4, offset = 0x4, fixed_abs, tag = 'smem constant byte address 0x4 - core index']
  #allocation1 [shape = 'u32[144,128]{1,0:T(1,128)}', space=vmem, size = 0x12000, scoped, tag = 'internal scratch']
  %s0 = inlined_call_operand.vmem [shape: f32[64,96], index: 0, kind: input, shape index: {}]
  %s1 = inlined_call_operand.vmem [shape: f32[96,48], index: 1, kind: input, shape index: {}]
  %s2 = inlined_call_operand.vmem [shape: f32[1,48], index: 2, kind: input, shape index: {}]
  %s3 = inlined_call_operand.vmem [shape: f32[1,48], index: 3, kind: input, shape index: {}]
  %s4 = inlined_call_operand.vmem [shape: f32[1,48], index: 4, kind: input, shape index: {}]
  %s5 = inlined_call_operand.vmem [shape: bf16[64,48], index: 5, kind: output, shape index: {}]
  %s6 = sld [smem:[#allocation0]]
  $region30: #{tpu_custom_call.1} parent=0
    _
  %s8 = ssub.s32 1, %s6
  %s9 = scalar_select 0, %s8, %s6
  // Predicated region
  $region2: #{tpu_custom_call.1} parent=0 // pred_check
    _
  $region3: #{tpu_custom_call.1} parent=0 // pred_check_branch
    %11 = sbr.rel (0) target = $region5
  $region4: #{tpu_custom_call.1} parent=0 // pred_region
    _
  $region5: #{tpu_custom_call.1} parent=0 // pred_fallthru
    _
  // Predicated region
  $region6: #{tpu_custom_call.1} parent=0 // pred_check
    _
  $region7: #{tpu_custom_call.1} parent=0 // pred_check_branch
    %13 = sbr.rel (0) target = $region9
  $region8: #{tpu_custom_call.1} parent=0 // pred_region
    _
  $region9: #{tpu_custom_call.1} parent=0 // pred_fallthru
    _
  // Predicated region
  $region10: #{tpu_custom_call.1} parent=0 // pred_check
    _
  $region11: #{tpu_custom_call.1} parent=0 // pred_check_branch
    %15 = sbr.rel (0) target = $region13
  $region12: #{tpu_custom_call.1} parent=0 // pred_region
    _
  $region13: #{tpu_custom_call.1} parent=0 // pred_fallthru
    _
  // Predicated region
  $region14: #{tpu_custom_call.1} parent=0 // pred_check
    _
  $region15: #{tpu_custom_call.1} parent=0 // pred_check_branch
    %17 = sbr.rel (0) target = $region17
  $region16: #{tpu_custom_call.1} parent=0 // pred_region
    _
  $region17: #{tpu_custom_call.1} parent=0 // pred_fallthru
    _
  // Predicated region
  $region18: #{tpu_custom_call.1} parent=0 // pred_check
    _
  $region19: #{tpu_custom_call.1} parent=0 // pred_check_branch
    %19 = sbr.rel (0) target = $region21
  $region20: #{tpu_custom_call.1} parent=0 // pred_region
    _
  $region21: #{tpu_custom_call.1} parent=0 // pred_fallthru
    _
  %v20 = vld [vmem:[%s0] sm:$0xff]
  %v21 = vld [vmem:[%s0 + $0x8] sm:$0xff]
  %v22 = vld [vmem:[%s0 + $0x10] sm:$0xff]
  %v23 = vld [vmem:[%s0 + $0x18] sm:$0xff]
  %v24 = vld [vmem:[%s0 + $0x20] sm:$0xff]
  %v25 = vld [vmem:[%s0 + $0x28] sm:$0xff]
  %v26 = vld [vmem:[%s0 + $0x30] sm:$0xff]
  %v27 = vld [vmem:[%s0 + $0x38] sm:$0xff]
  %v28 = vld [vmem:[%s1] sm:$0xff]
  %v29 = vld [vmem:[%s1 + $0x8] sm:$0xff]
  %v30 = vld [vmem:[%s1 + $0x10] sm:$0xff]
  %v31 = vld [vmem:[%s1 + $0x18] sm:$0xff]
  %v32 = vld [vmem:[%s1 + $0x20] sm:$0xff]
  %v33 = vld [vmem:[%s1 + $0x28] sm:$0xff]
  %v34 = vld [vmem:[%s1 + $0x30] sm:$0xff]
  %v35 = vld [vmem:[%s1 + $0x38] sm:$0xff]
  %v36 = vld [vmem:[%s1 + $0x40] sm:$0xff]
  %v37 = vld [vmem:[%s1 + $0x48] sm:$0xff]
  %v38 = vld [vmem:[%s1 + $0x50] sm:$0xff]
  %v39 = vld [vmem:[%s1 + $0x58] sm:$0xff]
  %v40 = vld [vmem:[%s2] sm:$0x1]
  %v42 = vlaneseq
  %v43 = vshrl.u32 %v42, 7
  %v44 = vsub.s32 0, %v43
  %v45 = vrot.slane %v40, %v44
  %vm47 = vcmask 785408
  %v49 = vsel %vm47, %v20, 0
  %v52 = vsel %vm47, %v21, 0
  %v55 = vsel %vm47, %v22, 0
  %v58 = vsel %vm47, %v23, 0
  %v61 = vsel %vm47, %v24, 0
  %v64 = vsel %vm47, %v25, 0
  %v67 = vsel %vm47, %v26, 0
  %v70 = vsel %vm47, %v27, 0
  %72 = vmatprep.subr.mxu0 0.0
  %73 = vmatpush1.msra.mxu0 0.0
  %74 = vmatprep.subr.mxu0 0.0
  %75 = vmatpush1.msra.mxu0 0.0
  %76 = vmatprep.subr.mxu0 0.0
  %77 = vmatpush1.msra.mxu0 0.0
  %78 = vmatprep.subr.mxu0 0.0
  %79 = vmatpush1.msra.mxu0 0.0
  %80 = vmatprep.subr.mxu0 0.0
  %81 = vmatpush1.msra.mxu0 %v39
  %82 = vmatprep.subr.mxu0 0.0
  %83 = vmatpush1.msra.mxu0 %v38
  %84 = vmatprep.subr.mxu0 0.0
  %85 = vmatpush1.msra.mxu0 %v37
  %86 = vmatprep.subr.mxu0 0.0
  %87 = vmatpush1.msra.mxu0 %v36
  %88 = vmatprep.subr.mxu0 0.0
  %89 = vmatpush1.msra.mxu0 %v35
  %90 = vmatprep.subr.mxu0 0.0
  %91 = vmatpush1.msra.mxu0 %v34
  %92 = vmatprep.subr.mxu0 0.0
  %93 = vmatpush1.msra.mxu0 %v33
  %94 = vmatprep.subr.mxu0 0.0
  %95 = vmatpush1.msra.mxu0 %v32
  %96 = vmatprep.subr.mxu0 0.0
  %97 = vmatpush1.msra.mxu0 %v31
  %98 = vmatprep.subr.mxu0 0.0
  %99 = vmatpush1.msra.mxu0 %v30
  %100 = vmatprep.subr.mxu0 0.0
  %101 = vmatpush1.msra.mxu0 %v29
  %102 = vmatprep.subr.mxu0 0.0
  %103 = vmatpush1.msra.mxu0 %v28
  %104 = vmatprep.subr.mxu0 0.0
  %105 = vmatpush2.msra.mxu0 0.0
  %106 = vmatprep.subr.mxu0 0.0
  %107 = vmatpush2.msra.mxu0 0.0
  %108 = vmatprep.subr.mxu0 0.0
  %109 = vmatpush2.msra.mxu0 0.0
  %110 = vmatprep.subr.mxu0 0.0
  %111 = vmatpush2.msra.mxu0 0.0
  %112 = vmatprep.subr.mxu0 0.0
  %113 = vmatpush2.msra.mxu0 0.0
  %114 = vmatprep.subr.mxu0 0.0
  %115 = vmatpush2.msra.mxu0 0.0
  %116 = vmatprep.subr.mxu0 0.0
  %117 = vmatpush2.msra.mxu0 0.0
  %118 = vmatprep.subr.mxu0 0.0
  %119 = vmatpush2.msra.mxu0 0.0
  %120 = vmatprep.subr.mxu0 0.0
  %121 = vmatpush2.msra.mxu0 0.0
  %122 = vmatprep.subr.mxu0 0.0
  %123 = vmatpush2.msra.mxu0 0.0
  %124 = vmatprep.subr.mxu0 0.0
  %125 = vmatpush2.msra.mxu0 0.0
  %126 = vmatprep.subr.mxu0 0.0
  %127 = vmatpush2.msra.mxu0 0.0
  %128 = vmatprep.subr.mxu0 0.0
  %129 = vmatpush2.msra.mxu0 0.0
  %130 = vmatprep.subr.mxu0 0.0
  %131 = vmatpush2.msra.mxu0 0.0
  %132 = vmatprep.subr.mxu0 0.0
  %133 = vmatpush2.msra.mxu0 0.0
  %134 = vmatprep.subr.mxu0 0.0
  %135 = vmatpush2.msra.mxu0 0.0
  %136 = vmatprep.mubr.f32.mxu0 0.0
  %137 = vmatmul.mubr.f32.gmra.mxu0 %v49
  %v138 = vpop.f32.mrf.mxu0
  %v139 = vadd.f32 %v45, %v138
  %v140 = vpop.f32.mrf.mxu0
  %141 = vmatprep.mubr.f32.mxu0 0.0
  %142 = vmatmul.mubr.f32.gmra.mxu0 %v52
  %v143 = vpop.f32.mrf.mxu0
  %v144 = vadd.f32 %v45, %v143
  %v145 = vpop.f32.mrf.mxu0
  %146 = vmatprep.mubr.f32.mxu0 0.0
  %147 = vmatmul.mubr.f32.gmra.mxu0 %v55
  %v148 = vpop.f32.mrf.mxu0
  %v149 = vadd.f32 %v45, %v148
  %v150 = vpop.f32.mrf.mxu0
  %151 = vmatprep.mubr.f32.mxu0 0.0
  %152 = vmatmul.mubr.f32.gmra.mxu0 %v58
  %v153 = vpop.f32.mrf.mxu0
  %v154 = vadd.f32 %v45, %v153
  %v155 = vpop.f32.mrf.mxu0
  %156 = vmatprep.mubr.f32.mxu0 0.0
  %157 = vmatmul.mubr.f32.gmra.mxu0 %v61
  %v158 = vpop.f32.mrf.mxu0
  %v159 = vadd.f32 %v45, %v158
  %v160 = vpop.f32.mrf.mxu0
  %161 = vmatprep.mubr.f32.mxu0 0.0
  %162 = vmatmul.mubr.f32.gmra.mxu0 %v64
  %v163 = vpop.f32.mrf.mxu0
  %v164 = vadd.f32 %v45, %v163
  %v165 = vpop.f32.mrf.mxu0
  %166 = vmatprep.mubr.f32.mxu0 0.0
  %167 = vmatmul.mubr.f32.gmra.mxu0 %v67
  %v168 = vpop.f32.mrf.mxu0
  %v169 = vadd.f32 %v45, %v168
  %v170 = vpop.f32.mrf.mxu0
  %171 = vmatprep.mubr.f32.mxu0 0.0
  %172 = vmatmul.mubr.f32.gmra.mxu0 %v70
  %v173 = vpop.f32.mrf.mxu0
  %v174 = vadd.f32 %v45, %v173
  %v175 = vpop.f32.mrf.mxu0
  %176 = vdwg.mxu0
  %vm177 = vcmask 392192
  %v178 = vsel %vm177, %v139, 0.0
  %179 = vadd.xlane.f32.xlu0 %v178
  %v180 = vpop.xlane.xlu0 %179
  %v181 = vsel %vm177, %v144, 0.0
  %182 = vadd.xlane.f32.xlu0 %v181
  %v183 = vpop.xlane.xlu0 %182
  %v184 = vsel %vm177, %v149, 0.0
  %185 = vadd.xlane.f32.xlu0 %v184
  %v186 = vpop.xlane.xlu0 %185
  %v187 = vsel %vm177, %v154, 0.0
  %188 = vadd.xlane.f32.xlu0 %v187
  %v189 = vpop.xlane.xlu0 %188
  %v190 = vsel %vm177, %v159, 0.0
  %191 = vadd.xlane.f32.xlu0 %v190
  %v192 = vpop.xlane.xlu0 %191
  %v193 = vsel %vm177, %v164, 0.0
  %194 = vadd.xlane.f32.xlu0 %v193
  %v195 = vpop.xlane.xlu0 %194
  %v196 = vsel %vm177, %v169, 0.0
  %197 = vadd.xlane.f32.xlu0 %v196
  %v198 = vpop.xlane.xlu0 %197
  %v199 = vsel %vm177, %v174, 0.0
  %200 = vadd.xlane.f32.xlu0 %v199
  %v201 = vpop.xlane.xlu0 %200
  %v202 = vrcp.pop 48.0
  %v203 = vmul.f32 %v180, %v202
  %v204 = vmul.f32 %v183, %v202
  %v205 = vmul.f32 %v186, %v202
  %v206 = vmul.f32 %v189, %v202
  %v207 = vmul.f32 %v192, %v202
  %v208 = vmul.f32 %v195, %v202
  %v209 = vmul.f32 %v198, %v202
  %v210 = vmul.f32 %v201, %v202
  %v211 = vsub.f32 %v139, %v203
  %v212 = vsub.f32 %v144, %v204
  %v213 = vsub.f32 %v149, %v205
  %v214 = vsub.f32 %v154, %v206
  %v215 = vsub.f32 %v159, %v207
  %v216 = vsub.f32 %v164, %v208
  %v217 = vsub.f32 %v169, %v209
  %v218 = vsub.f32 %v174, %v210
  %v219 = vmul.f32 %v211, %v211
  %v220 = vmul.f32 %v212, %v212
  %v221 = vmul.f32 %v213, %v213
  %v222 = vmul.f32 %v214, %v214
  %v223 = vmul.f32 %v215, %v215
  %v224 = vmul.f32 %v216, %v216
  %v225 = vmul.f32 %v217, %v217
  %v226 = vmul.f32 %v218, %v218
  %v227 = vsel %vm177, %v219, 0.0
  %228 = vadd.xlane.f32.xlu0 %v227
  %v229 = vpop.xlane.xlu0 %228
  %v230 = vsel %vm177, %v220, 0.0
  %231 = vadd.xlane.f32.xlu0 %v230
  %v232 = vpop.xlane.xlu0 %231
  %v233 = vsel %vm177, %v221, 0.0
  %234 = vadd.xlane.f32.xlu0 %v233
  %v235 = vpop.xlane.xlu0 %234
  %v236 = vsel %vm177, %v222, 0.0
  %237 = vadd.xlane.f32.xlu0 %v236
  %v238 = vpop.xlane.xlu0 %237
  %v239 = vsel %vm177, %v223, 0.0
  %240 = vadd.xlane.f32.xlu0 %v239
  %v241 = vpop.xlane.xlu0 %240
  %v242 = vsel %vm177, %v224, 0.0
  %243 = vadd.xlane.f32.xlu0 %v242
  %v244 = vpop.xlane.xlu0 %243
  %v245 = vsel %vm177, %v225, 0.0
  %246 = vadd.xlane.f32.xlu0 %v245
  %v247 = vpop.xlane.xlu0 %246
  %v248 = vsel %vm177, %v226, 0.0
  %249 = vadd.xlane.f32.xlu0 %v248
  %v250 = vpop.xlane.xlu0 %249
  %v251 = vmul.f32 %v229, %v202
  %v252 = vmul.f32 %v232, %v202
  %v253 = vmul.f32 %v235, %v202
  %v254 = vmul.f32 %v238, %v202
  %v255 = vmul.f32 %v241, %v202
  %v256 = vmul.f32 %v244, %v202
  %v257 = vmul.f32 %v247, %v202
  %v258 = vmul.f32 %v250, %v202
  %v259 = vadd.f32 %v251, 1e-05
  %v260 = vadd.f32 %v252, 1e-05
  %v261 = vadd.f32 %v253, 1e-05
  %v262 = vadd.f32 %v254, 1e-05
  %v263 = vadd.f32 %v255, 1e-05
  %v264 = vadd.f32 %v256, 1e-05
  %v265 = vadd.f32 %v257, 1e-05
  %v266 = vadd.f32 %v258, 1e-05
  %v267 = vrsqrt.pop %v259
  %v268 = vrsqrt.pop %v260
  %v269 = vrsqrt.pop %v261
  %v270 = vrsqrt.pop %v262
  %v271 = vrsqrt.pop %v263
  %v272 = vrsqrt.pop %v264
  %v273 = vrsqrt.pop %v265
  %v274 = vrsqrt.pop %v266
  %v275 = vmul.f32 %v211, %v267
  %v276 = vmul.f32 %v212, %v268
  %v277 = vmul.f32 %v213, %v269
  %v278 = vmul.f32 %v214, %v270
  %v279 = vmul.f32 %v215, %v271
  %v280 = vmul.f32 %v216, %v272
  %v281 = vmul.f32 %v217, %v273
  %v282 = vmul.f32 %v218, %v274
  %v283 = vld [vmem:[%s3] sm:$0x1]
  %v285 = vlaneseq
  %v286 = vshrl.u32 %v285, 7
  %v287 = vsub.s32 0, %v286
  %v288 = vrot.slane %v283, %v287
  %v290 = vmul.f32 %v275, %v288
  %v291 = vmul.f32 %v276, %v288
  %v292 = vmul.f32 %v277, %v288
  %v293 = vmul.f32 %v278, %v288
  %v294 = vmul.f32 %v279, %v288
  %v295 = vmul.f32 %v280, %v288
  %v296 = vmul.f32 %v281, %v288
  %v297 = vmul.f32 %v282, %v288
  %v298 = vld [vmem:[%s4] sm:$0x1]
  %v300 = vlaneseq
  %v301 = vshrl.u32 %v300, 7
  %v302 = vsub.s32 0, %v301
  %v303 = vrot.slane %v298, %v302
  %v305 = vadd.f32 %v290, %v303
  %v306 = vadd.f32 %v291, %v303
  %v307 = vadd.f32 %v292, %v303
  %v308 = vadd.f32 %v293, %v303
  %v309 = vadd.f32 %v294, %v303
  %v310 = vadd.f32 %v295, %v303
  %v311 = vadd.f32 %v296, %v303
  %v312 = vadd.f32 %v297, %v303
  %v313 = vpack.c.bf16 %v306, %v305
  %v314 = vpack.c.bf16 %v308, %v307
  %v315 = vpack.c.bf16 %v310, %v309
  %v316 = vpack.c.bf16 %v312, %v311
  %v321 = vunpack.c.l.b16 %v313
  %v322 = vunpack.c.h.b16 %v313
  %v323 = vunpack.c.l.b16 %v314
  %v324 = vunpack.c.h.b16 %v314
  %v325 = vunpack.c.l.b16 %v315
  %v326 = vunpack.c.h.b16 %v315
  %v327 = vunpack.c.l.b16 %v316
  %v328 = vunpack.c.h.b16 %v316
  %v329 = vpack.c.b16 %v321, %v321
  %v330 = vpack.c.b16 %v322, %v322
  %v331 = vpack.c.b16 %v323, %v323
  %v332 = vpack.c.b16 %v324, %v324
  %v333 = vpack.c.b16 %v325, %v325
  %v334 = vpack.c.b16 %v326, %v326
  %v335 = vpack.c.b16 %v327, %v327
  %v336 = vpack.c.b16 %v328, %v328
  %vm345 = vcmask 388096
  %346 = vst.msk [vmem:[%s5] sm:$0xf] %vm345, %v329
  %347 = vst.msk [vmem:[%s5 + $0x4] sm:$0xf] %vm345, %v330
  %348 = vst.msk [vmem:[%s5 + $0x8] sm:$0xf] %vm345, %v331
  %349 = vst.msk [vmem:[%s5 + $0xc] sm:$0xf] %vm345, %v332
  %350 = vst.msk [vmem:[%s5 + $0x10] sm:$0xf] %vm345, %v333
  %351 = vst.msk [vmem:[%s5 + $0x14] sm:$0xf] %vm345, %v334
  %352 = vst.msk [vmem:[%s5 + $0x18] sm:$0xf] %vm345, %v335
  %353 = vst.msk [vmem:[%s5 + $0x1c] sm:$0xf] %vm345, %v336
  // Predicated region
  $region22: #{tpu_custom_call.1} parent=0 // pred_check
    _
  $region23: #{tpu_custom_call.1} parent=0 // pred_check_branch
    %355 = sbr.rel (0) target = $region25
  $region24: #{tpu_custom_call.1} parent=0 // pred_region
    _
  $region25: #{tpu_custom_call.1} parent=0 // pred_fallthru
    _
  // Predicated region
  $region26: #{tpu_custom_call.1} parent=0 // pred_check
    _
  $region27: #{tpu_custom_call.1} parent=0 // pred_check_branch
    %357 = sbr.rel (0) target = $region29
  $region28: #{tpu_custom_call.1} parent=0 // pred_region
    _
  $region29: #{tpu_custom_call.1} parent=0 // pred_fallthru
    _

</llo_original>
